<compile_context>
chip_gen: v7x
topology: tpu7x:2x2x1
jax: 0.10.0
libtpu: 0.0.40
codegen_flags: <defaults>
</compile_context>

<pallas_src>
import functools

import jax
import jax.numpy as jnp
import numpy as np
from jax.experimental import pallas as pl
from jax.experimental.pallas import tpu as pltpu


def _sig_iou_kernel(pred_ref, gt_ref, out_ref, *, threshold, n_rows):
    """Per row-tile: reduce to (sum of per-row IoU, number of valid rows)."""
    pred = pred_ref[...]
    gt = gt_ref[...]
    tile_r = pred.shape[0]

    # torch.where(pred_sig > 0.75, 1, 0).int()  /  gt_sig.to(torch.int)
    pred_bin = (pred > threshold).astype(jnp.int32)
    gt_int = gt.astype(jnp.int32)

    # Sum as f32 (exact for counts < 2^24); lane reductions run on the XLU,
    # which has plenty of slack in this HBM-bound kernel.
    inter = jnp.sum((pred_bin & gt_int).astype(jnp.float32), axis=-1, keepdims=True)
    union = jnp.sum((pred_bin | gt_int).astype(jnp.float32), axis=-1, keepdims=True)

    # valid = sum(gt, dim=1) > 0 (computed on the original float gt, as in torch)
    valid = jnp.sum(gt.astype(jnp.float32), axis=-1, keepdims=True) > 0.0

    # Tail-row mask: grid may not divide N, so the last input block contains
    # garbage rows that must contribute nothing.  This mask is mandatory.
    row = (jax.lax.broadcasted_iota(jnp.int32, (tile_r, 1), 0)
           + pl.program_id(0) * tile_r)
    in_bounds = row < n_rows
    keep = valid & in_bounds

    # inter/union for valid in-bounds rows; 0 elsewhere.  (union == 0 on a
    # valid row -> NaN, intentionally propagated, matching torch.)
    ratio = jnp.where(keep, inter / union, 0.0)
    valid_f = jnp.where(keep, 1.0, 0.0)

    ratio_sum = jnp.sum(ratio, axis=0, keepdims=True)    # (1, 1)
    valid_cnt = jnp.sum(valid_f, axis=0, keepdims=True)  # (1, 1)

    # Pack the two partial scalars into one lane-aligned (8, 128) output block:
    # [0, 0] = sum of per-row IoU, [0, 1] = valid-row count, zeros elsewhere.
    lane = jax.lax.broadcasted_iota(jnp.int32, (8, 128), 1)
    sub = jax.lax.broadcasted_iota(jnp.int32, (8, 128), 0)
    first_row = sub == 0
    out_ref[...] = (jnp.where(first_row & (lane == 0), ratio_sum, 0.0)
                    + jnp.where(first_row & (lane == 1), valid_cnt, 0.0))


def _round_up(v, m):
    return (v + m - 1) // m * m


def sig_iou(pred_sig, gt_sig, *, threshold=0.75, target_block_bytes=None):
    """Pallas implementation of Sig_Iou.forward; returns {'Sig_Iou': scalar}."""
    assert pred_sig.shape == gt_sig.shape, "pred_sig and gt_sig must match in shape"
    assert pred_sig.ndim == 2, "Sig_Iou operates on 2-D (num_signals, signal_len) inputs"
    n, d = pred_sig.shape
    assert d < (1 << 24), "f32 count accumulation requires signal_len < 2^24"

    # Generation-aware sizing.
    try:
        vmem_cap = int(pltpu.get_tpu_info().vmem_capacity_bytes)
    except Exception:
        vmem_cap = 64 * 1024 * 1024  # conservative (v7x per-TC VMEM)
    if target_block_bytes is None:
        # v7x (64 MiB VMEM, 3.2 TB/s): ~4 MiB blocks; v5e/v6e (128 MiB): ~6 MiB.
        target_block_bytes = (4 << 20) if vmem_cap <= (64 << 20) else (6 << 20)

    itemsize = max(jnp.dtype(pred_sig.dtype).itemsize, jnp.dtype(gt_sig.dtype).itemsize)
    # Dtype-aware sublane packing granule: 8 for 4-byte, 16 for 2-byte, 32 for 1-byte.
    granule = max(8, 32 // itemsize)
    bytes_per_row = max(1, d * itemsize)
    tile_r = max(granule, (target_block_bytes // bytes_per_row) // granule * granule)
    tile_r = min(tile_r, _round_up(n, granule))

    num_tiles = pl.cdiv(n, tile_r)

    # Derive the scoped-VMEM limit from the actual block sizes:
    # 2 inputs x 2 pipeline buffers x block + double-buffered output + margin.
    block_bytes = tile_r * d * itemsize
    out_block_bytes = 8 * 128 * 4
    vmem_needed = 2 * 2 * block_bytes + 2 * out_block_bytes + (2 << 20)
    vmem_limit = int(min(max(vmem_needed, 32 << 20), vmem_cap))

    kernel = functools.partial(_sig_iou_kernel, threshold=float(threshold), n_rows=n)

    partials = pl.pallas_call(
        kernel,
        out_shape=jax.ShapeDtypeStruct((num_tiles * 8, 128), jnp.float32),
        grid_spec=pltpu.PrefetchScalarGridSpec(
            num_scalar_prefetch=0,
            grid=(num_tiles,),
            in_specs=[
                pl.BlockSpec((tile_r, d), lambda i: (i, 0)),
                pl.BlockSpec((tile_r, d), lambda i: (i, 0)),
            ],
            out_specs=pl.BlockSpec((8, 128), lambda i: (i, 0)),
        ),
        compiler_params=pltpu.CompilerParams(
            # No cross-step carry -> fully parallel grid.
            dimension_semantics=("parallel",),
            vmem_limit_bytes=vmem_limit,
        ),
    )(pred_sig, gt_sig)

    num = jnp.sum(partials[:, 0])   # sum of per-row IoU over valid rows
    den = jnp.sum(partials[:, 1])   # number of valid rows
    # den == 0 -> 0/0 -> NaN, matching the torch "no valid rows" branch.
    return {"Sig_Iou": num / den}


def _sig_iou_ref(pred_sig, gt_sig, threshold=0.75):
    """Pure-JAX reference of the torch forward."""
    pred_bin = (pred_sig > threshold).astype(jnp.int32)
    gt_int = gt_sig.astype(jnp.int32)
    valid = jnp.sum(gt_sig, axis=1) > 0
    inter = jnp.sum(pred_bin & gt_int, axis=1).astype(jnp.float32)
    union = jnp.sum(pred_bin | gt_int, axis=1).astype(jnp.float32)
    ratio = jnp.where(valid, inter / union, 0.0)
    return jnp.sum(ratio) / jnp.sum(valid.astype(jnp.float32))


if __name__ == "__main__":
    key = jax.random.PRNGKey(0)
    k1, k2, k3, k4 = jax.random.split(key, 4)

    # Case 1: small, divisible-ish shapes.
    n, d = 16, 64
    pred = jax.random.uniform(k1, (n, d), dtype=jnp.float32)
    gt = jax.random.bernoulli(k2, 0.5, (n, d)).astype(jnp.float32)
    out = sig_iou(pred, gt)
    loss = out["Sig_Iou"]
    jax.block_until_ready(loss)
    expected = _sig_iou_ref(pred, gt)
    np.testing.assert_allclose(np.asarray(loss), np.asarray(expected),
                               rtol=1e-5, atol=1e-6)

    # Case 2: N not a multiple of the tile (exercises the in-kernel tail mask),
    # multiple grid steps (small forced block), and some all-zero gt rows.
    n2, d2 = 300, 256
    pred2 = jax.random.uniform(k3, (n2, d2), dtype=jnp.float32)
    gt2 = jax.random.bernoulli(k4, 0.3, (n2, d2)).astype(jnp.float32)
    gt2 = gt2.at[5].set(0.0).at[77].set(0.0)  # invalid rows
    out2 = sig_iou(pred2, gt2, target_block_bytes=64 * 1024)
    loss2 = out2["Sig_Iou"]
    jax.block_until_ready(loss2)
    expected2 = _sig_iou_ref(pred2, gt2)
    np.testing.assert_allclose(np.asarray(loss2), np.asarray(expected2),
                               rtol=1e-5, atol=1e-6)

    print("KERNEL_OK")
</pallas_src>

<mosaic_0001>
module attributes {stable_mosaic.version = 11 : i64} {
  func.func @_sig_iou_kernel(%arg0: i32, %arg1: memref<16x64xf32, #tpu.memory_space<vmem>>, %arg2: memref<16x64xf32, #tpu.memory_space<vmem>>, %arg3: memref<8x128xf32, #tpu.memory_space<vmem>>) attributes {dimension_semantics = [#tpu.dimension_semantics<parallel>], iteration_bounds = array<i64: 1>, scalar_prefetch = 0 : i64, scratch_operands = 0 : i64, tpu.core_type = #tpu.core_type<tc>, window_params = [{transform_indices = @transform_0, window_bounds = array<i64: 16, 64>}, {transform_indices = @transform_1, window_bounds = array<i64: 16, 64>}, {transform_indices = @transform_2, window_bounds = array<i64: 8, 128>}]} {
    %c0 = arith.constant 0 : index
    %c0_0 = arith.constant 0 : index
    %0 = vector.load %arg1[%c0, %c0_0] : memref<16x64xf32, #tpu.memory_space<vmem>>, vector<16x64xf32>
    %c0_1 = arith.constant 0 : index
    %c0_2 = arith.constant 0 : index
    %1 = vector.load %arg2[%c0_1, %c0_2] : memref<16x64xf32, #tpu.memory_space<vmem>>, vector<16x64xf32>
    %cst = arith.constant 7.500000e-01 : f32
    %2 = vector.broadcast %cst : f32 to vector<16x64xf32>
    %3 = arith.cmpf ogt, %0, %2 : vector<16x64xf32>
    %4 = arith.extui %3 : vector<16x64xi1> to vector<16x64xi32>
    %5 = arith.fptosi %1 : vector<16x64xf32> to vector<16x64xi32>
    %6 = arith.andi %4, %5 : vector<16x64xi32>
    %7 = arith.sitofp %6 : vector<16x64xi32> to vector<16x64xf32>
    %cst_3 = arith.constant dense<0.000000e+00> : vector<16xf32>
    %8 = vector.multi_reduction <add>, %7, %cst_3 [1] : vector<16x64xf32> to vector<16xf32>
    %9 = vector.shape_cast %8 : vector<16xf32> to vector<16x1xf32>
    %10 = arith.ori %4, %5 : vector<16x64xi32>
    %11 = arith.sitofp %10 : vector<16x64xi32> to vector<16x64xf32>
    %cst_4 = arith.constant dense<0.000000e+00> : vector<16xf32>
    %12 = vector.multi_reduction <add>, %11, %cst_4 [1] : vector<16x64xf32> to vector<16xf32>
    %13 = vector.shape_cast %12 : vector<16xf32> to vector<16x1xf32>
    %cst_5 = arith.constant dense<0.000000e+00> : vector<16xf32>
    %14 = vector.multi_reduction <add>, %1, %cst_5 [1] : vector<16x64xf32> to vector<16xf32>
    %15 = vector.shape_cast %14 : vector<16xf32> to vector<16x1xf32>
    %cst_6 = arith.constant 0.000000e+00 : f32
    %16 = vector.broadcast %cst_6 : f32 to vector<16x1xf32>
    %17 = arith.cmpf ogt, %15, %16 : vector<16x1xf32>
    %18 = tpu.iota {dimensions = array<i32: 0>} : vector<16x1xi32>
    %c16_i32 = arith.constant 16 : i32
    %19 = arith.muli %arg0, %c16_i32 : i32
    %20 = vector.broadcast %19 : i32 to vector<16x1xi32>
    %21 = arith.addi %18, %20 : vector<16x1xi32>
    %c16_i32_7 = arith.constant 16 : i32
    %22 = vector.broadcast %c16_i32_7 : i32 to vector<16x1xi32>
    %23 = arith.cmpi slt, %21, %22 : vector<16x1xi32>
    %24 = arith.andi %17, %23 : vector<16x1xi1>
    %25 = arith.divf %9, %13 : vector<16x1xf32>
    %cst_8 = arith.constant 0.000000e+00 : f32
    %26 = vector.broadcast %cst_8 : f32 to vector<16x1xf32>
    %27 = arith.select %24, %25, %26 : vector<16x1xi1>, vector<16x1xf32>
    %cst_9 = arith.constant 1.000000e+00 : f32
    %cst_10 = arith.constant 0.000000e+00 : f32
    %28 = vector.broadcast %cst_9 : f32 to vector<16x1xf32>
    %29 = vector.broadcast %cst_10 : f32 to vector<16x1xf32>
    %30 = arith.select %24, %28, %29 : vector<16x1xi1>, vector<16x1xf32>
    %cst_11 = arith.constant dense<0.000000e+00> : vector<1xf32>
    %31 = vector.multi_reduction <add>, %27, %cst_11 [0] : vector<16x1xf32> to vector<1xf32>
    %32 = vector.shape_cast %31 : vector<1xf32> to vector<1x1xf32>
    %cst_12 = arith.constant dense<0.000000e+00> : vector<1xf32>
    %33 = vector.multi_reduction <add>, %30, %cst_12 [0] : vector<16x1xf32> to vector<1xf32>
    %34 = vector.shape_cast %33 : vector<1xf32> to vector<1x1xf32>
    %35 = tpu.iota {dimensions = array<i32: 1>} : vector<8x128xi32>
    %36 = tpu.iota {dimensions = array<i32: 0>} : vector<8x128xi32>
    %c0_i32 = arith.constant 0 : i32
    %37 = vector.broadcast %c0_i32 : i32 to vector<8x128xi32>
    %38 = arith.cmpi eq, %36, %37 : vector<8x128xi32>
    %c0_i32_13 = arith.constant 0 : i32
    %39 = vector.broadcast %c0_i32_13 : i32 to vector<8x128xi32>
    %40 = arith.cmpi eq, %35, %39 : vector<8x128xi32>
    %41 = arith.andi %38, %40 : vector<8x128xi1>
    %cst_14 = arith.constant 0.000000e+00 : f32
    %42 = vector.shape_cast %32 : vector<1x1xf32> to vector<1x1xf32>
    %43 = vector.broadcast %42 : vector<1x1xf32> to vector<8x128xf32>
    %44 = vector.broadcast %cst_14 : f32 to vector<8x128xf32>
    %45 = arith.select %41, %43, %44 : vector<8x128xi1>, vector<8x128xf32>
    %c1_i32 = arith.constant 1 : i32
    %46 = vector.broadcast %c1_i32 : i32 to vector<8x128xi32>
    %47 = arith.cmpi eq, %35, %46 : vector<8x128xi32>
    %48 = arith.andi %38, %47 : vector<8x128xi1>
    %cst_15 = arith.constant 0.000000e+00 : f32
    %49 = vector.shape_cast %34 : vector<1x1xf32> to vector<1x1xf32>
    %50 = vector.broadcast %49 : vector<1x1xf32> to vector<8x128xf32>
    %51 = vector.broadcast %cst_15 : f32 to vector<8x128xf32>
    %52 = arith.select %48, %50, %51 : vector<8x128xi1>, vector<8x128xf32>
    %53 = arith.addf %45, %52 : vector<8x128xf32>
    %c0_16 = arith.constant 0 : index
    %c0_17 = arith.constant 0 : index
    %54 = vector.load %arg3[%c0_16, %c0_17] : memref<8x128xf32, #tpu.memory_space<vmem>>, vector<8x128xf32>
    tpu.vector_store %arg3[%c0_16, %c0_17], %53 {strides = array<i32>} : memref<8x128xf32, #tpu.memory_space<vmem>>, vector<8x128xf32>,
    return
  }
  func.func @transform_0(%arg0: i32) -> (i32, i32) {
    %c0_i32 = arith.constant 0 : i32
    %c0_i32_0 = arith.constant 0 : i32
    return %arg0, %c0_i32 : i32, i32
  }
  func.func @transform_1(%arg0: i32) -> (i32, i32) {
    %c0_i32 = arith.constant 0 : i32
    %c0_i32_0 = arith.constant 0 : i32
    return %arg0, %c0_i32 : i32, i32
  }
  func.func @transform_2(%arg0: i32) -> (i32, i32) {
    %c0_i32 = arith.constant 0 : i32
    %c0_i32_0 = arith.constant 0 : i32
    return %arg0, %c0_i32 : i32, i32
  }
}

</mosaic_0001>

<llo_original>
// kernel: tpu_custom_call.1
$region0: #{tpu_custom_call.1}
  #allocation0 [shape = 'u32[]', space=smem, size = 0x4, offset = 0x4, fixed_abs, tag = 'smem constant byte address 0x4 - core index']
  #allocation1 [shape = 'u32[144,128]{1,0:T(1,128)}', space=vmem, size = 0x12000, scoped, tag = 'internal scratch']
  %s0 = inlined_call_operand.hbm [shape: f32[16,64], index: 0, kind: input, shape index: {}]
  %s1 = inlined_call_operand.hbm [shape: f32[16,64], index: 1, kind: input, shape index: {}]
  %s2 = inlined_call_operand.hbm [shape: f32[8,128], index: 2, kind: output, shape index: {}]
  %s3 = sld [smem:[#allocation0]]
  $region26: #{tpu_custom_call.1} parent=0
    _
  %s5 = ssub.s32 1, %s3
  %s6 = scalar_select 0, %s5, %s3
  $region1: #{tpu_custom_call.1} parent=0
    #allocation2 [shape = 'u8[8192]{0}', space=vmem, size = 0x2000, scoped, tag = 'input window, operand 0, single buffered']
    #allocation3 [shape = 's32[1]{0}', space=sflag, size = 0x4, scoped, tag = 'scoped memory for tpu_custom_call.1']
    #allocation4 [shape = 's32[1]{0}', space=sflag, size = 0x4, scoped, tag = 'scoped memory for tpu_custom_call.1']
    #allocation5 [shape = 'u8[8192]{0}', space=vmem, size = 0x2000, scoped, tag = 'input window, operand 1, single buffered']
    #allocation6 [shape = 's32[1]{0}', space=sflag, size = 0x4, scoped, tag = 'scoped memory for tpu_custom_call.1']
    #allocation7 [shape = 'u8[4096]{0}', space=vmem, size = 0x1000, scoped, tag = 'output window, operand 0, single buffered']
    %7 = vsyncpa [#allocation3], 0
    %8 = vsyncpa [#allocation6], 0
    %9 = vsyncpa [#allocation4], 0
    // Predicated region
    $region2: #{tpu_custom_call.1} parent=1 // pred_check
      _
    $region3: #{tpu_custom_call.1} parent=1 // pred_check_branch
      %11 = sbr.rel (0) target = $region5
    $region4: #{tpu_custom_call.1} parent=1 // pred_region
      %s13 = ssub.s32 256, 256
      %14 = vsyncadd [#allocation3], %s13
      %s15 = sshll.u32 [#allocation2], 4
      %s16 = int_to_ptr.vmem [resolvable:$true] %s15
      %21 = dma.hbm_to_vmem [thread:$0]  %s0, 256, %s16, [#allocation3], 128, 128, 8
    $region5: #{tpu_custom_call.1} parent=1 // pred_fallthru
      _
    // Predicated region
    $region6: #{tpu_custom_call.1} parent=1 // pred_check
      _
    $region7: #{tpu_custom_call.1} parent=1 // pred_check_branch
      %23 = sbr.rel (0) target = $region9
    $region8: #{tpu_custom_call.1} parent=1 // pred_region
      %s25 = ssub.s32 256, 256
      %26 = vsyncadd [#allocation6], %s25
      %s27 = sshll.u32 [#allocation5], 4
      %s28 = int_to_ptr.vmem [resolvable:$true] %s27
      %33 = dma.hbm_to_vmem [thread:$0]  %s1, 256, %s28, [#allocation6], 128, 128, 8
    $region9: #{tpu_custom_call.1} parent=1 // pred_fallthru
      _
    // Predicated region
    $region10: #{tpu_custom_call.1} parent=1 // pred_check
      _
    $region11: #{tpu_custom_call.1} parent=1 // pred_check_branch
      %35 = sbr.rel (0) target = $region13
    $region12: #{tpu_custom_call.1} parent=1 // pred_region
      %36 = dma.done [#allocation3], 256
    $region13: #{tpu_custom_call.1} parent=1 // pred_fallthru
      _
    // Predicated region
    $region14: #{tpu_custom_call.1} parent=1 // pred_check
      _
    $region15: #{tpu_custom_call.1} parent=1 // pred_check_branch
      %38 = sbr.rel (0) target = $region17
    $region16: #{tpu_custom_call.1} parent=1 // pred_region
      %39 = dma.done [#allocation6], 256
    $region17: #{tpu_custom_call.1} parent=1 // pred_fallthru
      _
    %v40 = vld [vmem:[#allocation2] sm:$0xff]
    %v41 = vld [vmem:[#allocation2 + $0x8] sm:$0xff]
    %v42 = vld [vmem:[#allocation5] sm:$0xff]
    %v43 = vld [vmem:[#allocation5 + $0x8] sm:$0xff]
    %vm44 = vcmp.gt.f32.partialorder %v40, 0.75
    %vm45 = vcmp.gt.f32.partialorder %v41, 0.75
    %v46 = vsel %vm44, 1, 0
    %v47 = vsel %vm45, 1, 0
    %v48 = vcvt.f32.s32.to.zero.pseudo %v42
    %v49 = vcvt.f32.s32.to.zero.pseudo %v43
    %v50 = vand.u32 %v46, %v48
    %v51 = vand.u32 %v47, %v49
    %v52 = vcvt.s32.f32 %v50
    %v53 = vcvt.s32.f32 %v51
    %vm54 = vcmask 523264
    %v55 = vsel %vm54, %v52, 0.0
    %56 = vadd.xlane.f32.xlu0 %v55
    %v57 = vpop.xlane.xlu0 %56
    %v58 = vsel %vm54, %v53, 0.0
    %59 = vadd.xlane.f32.xlu0 %v58
    %v60 = vpop.xlane.xlu0 %59
    %v61 = vor.u32 %v46, %v48
    %v62 = vor.u32 %v47, %v49
    %v63 = vcvt.s32.f32 %v61
    %v64 = vcvt.s32.f32 %v62
    %v65 = vsel %vm54, %v63, 0.0
    %66 = vadd.xlane.f32.xlu0 %v65
    %v67 = vpop.xlane.xlu0 %66
    %v68 = vsel %vm54, %v64, 0.0
    %69 = vadd.xlane.f32.xlu0 %v68
    %v70 = vpop.xlane.xlu0 %69
    %v71 = vsel %vm54, %v42, 0.0
    %72 = vadd.xlane.f32.xlu0 %v71
    %v73 = vpop.xlane.xlu0 %72
    %v74 = vsel %vm54, %v43, 0.0
    %75 = vadd.xlane.f32.xlu0 %v74
    %v76 = vpop.xlane.xlu0 %75
    %vm77 = vcmp.gt.f32.partialorder %v73, 0.0
    %vm78 = vcmp.gt.f32.partialorder %v76, 0.0
    %v79 = vlaneseq
    %v80 = vshrl.u32 %v79, 7
    %v81 = vadd.s32 %v80, 8
    %s82 = smul.u32 0, 16
    %v83 = vstv %s82
    %v84 = vadd.s32 %v80, %v83
    %v85 = vadd.s32 %v81, %v83
    %vm86 = vcmp.lt.s32.totalorder %v84, 16
    %vm87 = vcmp.lt.s32.totalorder %v85, 16
    %vm88 = vmand %vm77, %vm86
    %vm89 = vmand %vm78, %vm87
    %v90 = vrcp.pop %v67
    %v91 = vmul.f32 %v57, %v90
    %v92 = vrcp.pop %v70
    %v93 = vmul.f32 %v60, %v92
    %v94 = vsel %vm88, %v91, 0.0
    %v95 = vsel %vm89, %v93, 0.0
    %v96 = vsel %vm88, 1.0, 0.0
    %v97 = vsel %vm89, 1.0, 0.0
    %v98 = vadd.f32 %v94, %v95
    %v99 = vrot.slane %v98, 4
    %v100 = vadd.f32 %v98, %v99
    %v101 = vrot.slane %v100, 2
    %v102 = vadd.f32 %v100, %v101
    %v103 = vrot.slane %v102, 1
    %v104 = vadd.f32 %v102, %v103
    %v105 = vadd.f32 %v96, %v97
    %v106 = vrot.slane %v105, 4
    %v107 = vadd.f32 %v105, %v106
    %v108 = vrot.slane %v107, 2
    %v109 = vadd.f32 %v107, %v108
    %v110 = vrot.slane %v109, 1
    %v111 = vadd.f32 %v109, %v110
    %v112 = vlaneseq
    %v113 = vand.u32 %v112, 127
    %vm114 = vcmp.eq.s32.totalorder %v80, 0
    %vm115 = vcmp.eq.s32.totalorder %v113, 0
    %vm116 = vmand %vm114, %vm115
    %v117 = vsel %vm116, %v104, 0.0
    %vm118 = vcmp.eq.s32.totalorder %v113, 1
    %vm119 = vmand %vm114, %vm118
    %v120 = vsel %vm119, %v111, 0.0
    %v121 = vadd.f32 %v117, %v120
    %122 = vst [vmem:[#allocation7] sm:$0xff] %v121
    // Predicated region
    $region18: #{tpu_custom_call.1} parent=1 // pred_check
      _
    $region19: #{tpu_custom_call.1} parent=1 // pred_check_branch
      %124 = sbr.rel (0) target = $region21
    $region20: #{tpu_custom_call.1} parent=1 // pred_region
      %s126 = ssub.s32 128, 128
      %127 = vsyncadd [#allocation4], %s126
      %s129 = sshll.u32 [#allocation7], 4
      %s130 = int_to_ptr.vmem [resolvable:$true] %s129
      %132 = dma.vmem_to_hbm [thread:$0]  %s130, 128, %s2, [#allocation4]
    $region21: #{tpu_custom_call.1} parent=1 // pred_fallthru
      _
    // Predicated region
    $region22: #{tpu_custom_call.1} parent=1 // pred_check
      _
    $region23: #{tpu_custom_call.1} parent=1 // pred_check_branch
      %134 = sbr.rel (0) target = $region25
    $region24: #{tpu_custom_call.1} parent=1 // pred_region
      %135 = dma.done [#allocation4], 128
    $region25: #{tpu_custom_call.1} parent=1 // pred_fallthru
      _
    %136 = vsyncpa [#allocation3], 1
    %137 = vsyncpa [#allocation6], 1
    %138 = vsyncpa [#allocation4], 1

</llo_original>
